<compile_context>
chip_gen: v7x
topology: tpu7x:2x2x1
jax: 0.10.0
libtpu: 0.0.40
codegen_flags: <defaults>
</compile_context>

<pallas_src>
import functools

import numpy as np
import jax
import jax.numpy as jnp
from jax import lax
from jax.experimental import pallas as pl
from jax.experimental.pallas import tpu as pltpu


D_PAD = 128            # lane-padded model width   (d_model = 32  -> 128)
DFF_PAD = 128          # lane-padded FFN width     (dff     = 64  -> 128)
VMEM_LIMIT = 48 * 1024 * 1024   # explicit scoped-VMEM budget (headroom on v7x)

_VMEM = pl.BlockSpec(memory_space=pltpu.MemorySpace.VMEM)


# ----------------------------------------------------------------------------
# math helpers usable inside Pallas kernels
# ----------------------------------------------------------------------------
def _mish(x):
    # mish(x) = x * tanh(softplus(x)) = x * ((1+e^x)^2 - 1) / ((1+e^x)^2 + 1)
    # -> a single transcendental (exp) + EUP approx reciprocal instead of
    #    exp + log1p + tanh.  Clamp keeps exp finite (for x > 20, mish(x) ~ x).
    t = jnp.exp(jnp.minimum(x, 20.0))
    u = (1.0 + t) * (1.0 + t)
    return x * (u - 1.0) * pl.reciprocal(u + 1.0, approx=True)


def _layernorm_padded(x, w, b, d_real, eps=1e-5):
    # x has zero-filled padding lanes beyond d_real; statistics are taken over
    # the real width.  w/b are zero in the padded lanes so padded output is 0.
    inv_d = 1.0 / float(d_real)
    mu = jnp.sum(x, axis=-1, keepdims=True) * inv_d
    ex2 = jnp.sum(x * x, axis=-1, keepdims=True) * inv_d
    var = jnp.maximum(ex2 - mu * mu, 0.0)
    return (x - mu) * lax.rsqrt(var + eps) * w + b


# ----------------------------------------------------------------------------
# Kernel 1: "GRCU" layer (approximation) + F.mish, fused over the T timesteps
#   TODO(synk): the GRCU class (EvolveGCN-style recurrent weight evolution) is
#   not provided in the reference source; approximated as relu(A @ X @ W).
#   nodes_mask_list is therefore unused.
# ----------------------------------------------------------------------------
def _grcu_kernel(a_ref, x_ref, w_ref, o_ref):
    xw = jnp.dot(x_ref[...].astype(jnp.bfloat16), w_ref[...],
                 preferred_element_type=jnp.float32)
    h = jnp.dot(a_ref[...].astype(jnp.bfloat16), xw.astype(jnp.bfloat16),
                preferred_element_type=jnp.float32)
    h = jnp.maximum(h, 0.0)          # GRCU activation (F.relu default)
    o_ref[...] = _mish(h)            # F.mish applied to node embeddings


def grcu_layers(A, X, w):
    """A: (T, N, N) f32, X: (T, N, in_ch) f32, w: (in_ch, d_pad) bf16."""
    T, N, _ = A.shape
    in_ch = X.shape[2]
    dp = w.shape[1]
    return pl.pallas_call(
        _grcu_kernel,
        out_shape=jax.ShapeDtypeStruct((T, N, dp), jnp.float32),
        grid=(T,),
        in_specs=[
            pl.BlockSpec((None, N, N), lambda t: (t, 0, 0)),
            pl.BlockSpec((None, N, in_ch), lambda t: (t, 0, 0)),
            pl.BlockSpec((in_ch, dp), lambda t: (0, 0)),
        ],
        out_specs=pl.BlockSpec((None, N, dp), lambda t: (t, 0, 0)),
        compiler_params=pltpu.CompilerParams(
            dimension_semantics=("parallel",),        # megacore on v7x
            vmem_limit_bytes=VMEM_LIMIT),
    )(A, X, w)


# ----------------------------------------------------------------------------
# Kernel 2: dense HypergraphConv (PyG semantics, use_attention=False) + F.mish
#   out = D^-1 H W B^-1 H^T (X Theta) + bias   (W = I)
#   host folds B^{-1/2} into G = H B^{-1/2}  so   G G^T = H B^-1 H^T
#   and only ONE dense incidence matrix is shipped to VMEM.
# ----------------------------------------------------------------------------
def _hyperconv_kernel(xe_ref, theta_ref, bias_ref, g_ref, dinv_ref, o_ref):
    # edge_input_channels == 1 -> X @ Theta is a rank-1 outer product: VPU only.
    xt = xe_ref[...] * theta_ref[...]                                   # (E, dp)
    g = g_ref[...]                                                      # (E, M)
    # G^T @ xt without materializing G^T (transposed lhs contraction)
    he = lax.dot_general(g, xt, (((0,), (0,)), ((), ())),
                         preferred_element_type=jnp.float32)            # (M, dp)
    out = (jnp.dot(g, he, preferred_element_type=jnp.float32)
           * dinv_ref[...] + bias_ref[...])                             # (E, dp)
    o_ref[...] = _mish(out)


def hypergraph_conv(edge_attr, theta, bias, G, dinv):
    E = edge_attr.shape[0]
    dp = theta.shape[1]
    return pl.pallas_call(
        _hyperconv_kernel,
        out_shape=jax.ShapeDtypeStruct((E, dp), jnp.float32),
        in_specs=[_VMEM] * 5,
        out_specs=_VMEM,
        compiler_params=pltpu.CompilerParams(vmem_limit_bytes=VMEM_LIMIT),
    )(edge_attr, theta, bias, G, dinv)


# ----------------------------------------------------------------------------
# Kernel 3: pre-linear + TransformerEncoder (post-norm, relu, nhead=1,
#           eval/no-dropout) + mean over tokens + classifier.
#           Grid over the layer axis; residual stream kept in VMEM scratch.
# ----------------------------------------------------------------------------
def _encoder_kernel(x_ref, lin_w_ref, lin_b_ref,
                    qkv_w_ref, qkv_b_ref, ow_ref, ob_ref,
                    n1w_ref, n1b_ref, f1w_ref, f1b_ref,
                    f2w_ref, f2b_ref, n2w_ref, n2b_ref,
                    cw_ref, cb_ref, o_ref, x_state,
                    *, num_layers, d_real, d_pad, inv_tokens):
    l = pl.program_id(0)
    scale = 1.0 / float(np.sqrt(d_real))    # nhead == 1 -> head_dim == d_real

    @pl.when(l == 0)
    def _():
        # self.linear applied once; x_state carries the residual stream.
        x_state[...] = (jnp.dot(x_ref[...].astype(jnp.bfloat16), lin_w_ref[...],
                                preferred_element_type=jnp.float32)
                        + lin_b_ref[...])

    x = x_state[...]
    xb = x.astype(jnp.bfloat16)

    # --- self attention (nhead == 1, eval / no dropout) ----------------------
    qkv = (jnp.dot(xb, qkv_w_ref[...], preferred_element_type=jnp.float32)
           + qkv_b_ref[...])
    q = qkv[:, 0:d_pad].astype(jnp.bfloat16)
    k = qkv[:, d_pad:2 * d_pad].astype(jnp.bfloat16)
    v = qkv[:, 2 * d_pad:3 * d_pad].astype(jnp.bfloat16)
    s = lax.dot_general(q, k, (((1,), (1,)), ((), ())),        # q @ k^T
                        preferred_element_type=jnp.float32) * scale
    s = s - jnp.max(s, axis=-1, keepdims=True)
    pexp = jnp.exp(s)
    attn = pexp * pl.reciprocal(jnp.sum(pexp, axis=-1, keepdims=True),
                                approx=True)
    ctx = jnp.dot(attn.astype(jnp.bfloat16), v,
                  preferred_element_type=jnp.float32)
    a_out = jnp.dot(ctx.astype(jnp.bfloat16), ow_ref[...],
                    preferred_element_type=jnp.float32) + ob_ref[...]
    # TODO(synk): dropout (train-mode p=0.1) omitted -> eval semantics.
    x = _layernorm_padded(x + a_out, n1w_ref[...], n1b_ref[...], d_real)

    # --- feed forward ---------------------------------------------------------
    h = jnp.maximum(
        jnp.dot(x.astype(jnp.bfloat16), f1w_ref[...],
                preferred_element_type=jnp.float32) + f1b_ref[...], 0.0)
    ff = jnp.dot(h.astype(jnp.bfloat16), f2w_ref[...],
                 preferred_element_type=jnp.float32) + f2b_ref[...]
    x = _layernorm_padded(x + ff, n2w_ref[...], n2b_ref[...], d_real)
    x_state[...] = x

    @pl.when(l == num_layers - 1)
    def _():
        # reference does transformer_out.mean(0) over ALL tokens (including the
        # graph token and the orthogonal node-identifier rows) then classifier.
        pooled = jnp.sum(x, axis=0, keepdims=True) * inv_tokens        # (1, dp)
        o_ref[...] = (jnp.dot(pooled, cw_ref[...],
                              preferred_element_type=jnp.float32) + cb_ref[...])


def tokengt_encode(all_emb, p):
    L = p["qkv_w"].shape[0]
    S, dp = all_emb.shape
    d_real = p["d_real"]

    def full_spec(arr):
        nd = arr.ndim
        return pl.BlockSpec(tuple(arr.shape), lambda l, _nd=nd: (0,) * _nd)

    def layer_spec(arr):
        nd = arr.ndim
        return pl.BlockSpec((None,) + tuple(arr.shape[1:]),
                            lambda l, _nd=nd: (l,) + (0,) * (_nd - 1))

    inputs = (all_emb, p["lin_w"], p["lin_b"],
              p["qkv_w"], p["qkv_b"], p["out_w"], p["out_b"],
              p["n1_w"], p["n1_b"], p["ff1_w"], p["ff1_b"],
              p["ff2_w"], p["ff2_b"], p["n2_w"], p["n2_b"],
              p["cls_w"], p["cls_b"])
    per_layer = {3, 4, 5, 6, 7, 8, 9, 10, 11, 12, 13, 14}
    in_specs = [layer_spec(a) if i in per_layer else full_spec(a)
                for i, a in enumerate(inputs)]

    kernel = functools.partial(_encoder_kernel, num_layers=L, d_real=d_real,
                               d_pad=dp, inv_tokens=1.0 / S)
    out = pl.pallas_call(
        kernel,
        out_shape=jax.ShapeDtypeStruct((1, 1), jnp.float32),
        grid=(L,),
        in_specs=in_specs,
        out_specs=pl.BlockSpec((1, 1), lambda l: (0, 0)),
        scratch_shapes=[pltpu.VMEM((S, dp), jnp.float32)],
        compiler_params=pltpu.CompilerParams(
            dimension_semantics=("arbitrary",),   # sequential layer dependency
            vmem_limit_bytes=VMEM_LIMIT),
    )(*inputs)
    return out.reshape(1)


# ----------------------------------------------------------------------------
# numpy glue: time_alignment / DHT / block_diag (data-dependent index building)
# ----------------------------------------------------------------------------
def time_alignment_np(edge_weight, max_num_nodes, time_steps):
    adj = np.zeros((max_num_nodes, max_num_nodes), np.float32)
    stride = max_num_nodes // time_steps
    for i in range(stride):
        idx = list(range(i, max_num_nodes, stride))
        for j in range(len(idx) - 1):
            adj[idx[j], idx[j + 1]] = edge_weight
    return adj


def dht_np(adjs, temporal_edge):
    temporal = temporal_edge + temporal_edge.T
    static_idx = np.stack(np.nonzero(adjs))        # (2, Es) row-major order
    temporal_idx = np.stack(np.nonzero(temporal))  # (2, 2*Et)
    temporal_edge_num = temporal_idx.shape[1] // 2
    edge_index = np.hstack([static_idx, temporal_idx])
    num_edge = edge_index.shape[1]
    node_ids = np.repeat(np.arange(num_edge), 2)
    hyperedge_ids = edge_index.T.reshape(-1)
    hyperedge_index = np.stack([node_ids, hyperedge_ids]).astype(np.int64)
    return hyperedge_index, temporal_edge_num


def block_diag_np(mats):
    n = sum(m.shape[0] for m in mats)
    out = np.zeros((n, n), np.float32)
    off = 0
    for m in mats:
        k = m.shape[0]
        out[off:off + k, off:off + k] = m
        off += k
    return out


# ----------------------------------------------------------------------------
# parameter init (deterministic, synthetic), zero-padded to lane width
# ----------------------------------------------------------------------------
def _pad_to(x, shape):
    pads = [(0, t - s) for s, t in zip(x.shape, shape)]
    return jnp.pad(x, pads)


def init_params(key, in_channels, d_real, dff_real, num_layers, num_nodes_orth,
                total_graph_size=1, d_pad=D_PAD, dff_pad=DFF_PAD):
    keys = jax.random.split(key, 16)
    g = iter(keys)
    s = 0.1

    def rnd(shape):
        return (s * jax.random.normal(next(g), shape)).astype(jnp.float32)

    L, d, dff, dp, dffp = num_layers, d_real, dff_real, d_pad, dff_pad

    # place real Q/K/V blocks at the padded 0 / dp / 2*dp column offsets
    qkv_real = rnd((L, d, 3 * d))
    qkv_w = jnp.zeros((L, dp, 3 * dp), jnp.float32)
    for h in range(3):
        qkv_w = qkv_w.at[:, :d, h * dp:h * dp + d].set(
            qkv_real[:, :, h * d:(h + 1) * d])

    p = {
        "grcu_w":    _pad_to(rnd((in_channels, d)),
                             (in_channels, dp)).astype(jnp.bfloat16),
        "hg_theta":  _pad_to(rnd((1, d)), (1, dp)),
        "hg_bias":   jnp.zeros((1, dp), jnp.float32),
        "topk_w":    _pad_to(rnd((d,)), (dp,)),
        "type_emb":  _pad_to(rnd((3, d)), (3, dp)),
        "graph_tok": _pad_to(rnd((total_graph_size, d)),
                             (total_graph_size, dp)),
        "lin_w":     _pad_to(rnd((d, d)), (dp, dp)).astype(jnp.bfloat16),
        "lin_b":     jnp.zeros((1, dp), jnp.float32),
        "qkv_w":     qkv_w.astype(jnp.bfloat16),
        "qkv_b":     jnp.zeros((L, 1, 3 * dp), jnp.float32),
        "out_w":     _pad_to(rnd((L, d, d)), (L, dp, dp)).astype(jnp.bfloat16),
        "out_b":     jnp.zeros((L, 1, dp), jnp.float32),
        "n1_w":      _pad_to(jnp.ones((L, 1, d), jnp.float32), (L, 1, dp)),
        "n1_b":      jnp.zeros((L, 1, dp), jnp.float32),
        "ff1_w":     _pad_to(rnd((L, d, dff)),
                             (L, dp, dffp)).astype(jnp.bfloat16),
        "ff1_b":     jnp.zeros((L, 1, dffp), jnp.float32),
        "ff2_w":     _pad_to(rnd((L, dff, d)),
                             (L, dffp, dp)).astype(jnp.bfloat16),
        "ff2_b":     jnp.zeros((L, 1, dp), jnp.float32),
        "n2_w":      _pad_to(jnp.ones((L, 1, d), jnp.float32), (L, 1, dp)),
        "n2_b":      jnp.zeros((L, 1, dp), jnp.float32),
        "cls_w":     _pad_to(rnd((d, 1)), (dp, 1)),
        "cls_b":     jnp.zeros((1, 1), jnp.float32),
        "d_real":    d,
    }
    # TODO(synk): gaussian_orthogonal_random_matrix (performer) approximated
    # with a deterministic QR-based orthogonal block scaled by sqrt(d).
    rng = np.random.RandomState(0)
    q, _ = np.linalg.qr(rng.randn(d, d))
    orth = (q[:num_nodes_orth] * np.sqrt(d)).astype(np.float32)
    p["orth"] = _pad_to(jnp.asarray(orth), (num_nodes_orth, dp))
    return p


# ----------------------------------------------------------------------------
# full TokenGT forward
# ----------------------------------------------------------------------------
def tokengt_forward(A_list, Nodes_list, params, *, time_steps,
                    static_edge_topk, graph_id=0,
                    use_node_identifier=True, use_type_identifier=True):
    # ---- GRCU layers + mish: single Pallas call, grid over timesteps --------
    A = jnp.stack(A_list).astype(jnp.float32)                 # (T, N, N)
    X = jnp.stack(Nodes_list).astype(jnp.float32)             # (T, N, in_ch)
    node_embedding = grcu_layers(A, X, params["grcu_w"])      # (T, N, dp)
    node_embedding = node_embedding.reshape(-1, node_embedding.shape[-1])

    # ---- host graph-structure glue (numpy, data-dependent shapes).  Dispatch
    # of the GRCU kernel above is async, so this overlaps device execution. ---
    A_np = [np.asarray(a, np.float32) for a in A_list]
    adjs = block_diag_np(A_np)
    tot = adjs.shape[0]
    off = tot // time_steps
    temporal_edge = time_alignment_np(1.0, tot, time_steps)
    adjs_all = adjs + np.eye(tot, tot, off, dtype=np.float32) \
                    + np.eye(tot, tot, -off, dtype=np.float32)
    row, col = np.nonzero(adjs_all)
    edge_attr = adjs_all[row, col].astype(np.float32).reshape(-1, 1)

    hyperedge_index, temporal_edge_num = dht_np(adjs, temporal_edge)
    E = hyperedge_index.shape[1] // 2
    assert edge_attr.shape[0] == E, "edge_attr / hyperedge count mismatch"
    M = int(hyperedge_index[1].max()) + 1
    H = np.zeros((E, M), np.float32)
    np.add.at(H, (hyperedge_index[0], hyperedge_index[1]), 1.0)
    deg_node = H.sum(axis=1)
    deg_edge = H.sum(axis=0)
    dinv = np.where(deg_node > 0, 1.0 / np.maximum(deg_node, 1e-12),
                    0.0).astype(np.float32).reshape(-1, 1)
    binv_sqrt = np.where(deg_edge > 0,
                         1.0 / np.sqrt(np.maximum(deg_edge, 1e-12)),
                         0.0).astype(np.float32)
    G = (H * binv_sqrt[None, :]).astype(np.float32)   # G G^T = H B^-1 H^T

    # ---- HypergraphConv + mish (Pallas) --------------------------------------
    edge_embedding = hypergraph_conv(
        jnp.asarray(edge_attr), params["hg_theta"], params["hg_bias"],
        jnp.asarray(G), jnp.asarray(dinv))                    # (E, dp)

    static_count = E - temporal_edge_num
    static_edge_embedding = edge_embedding[:static_count]

    # ---- TopKPooling (glue: scoring + top-k selection) -----------------------
    w = params["topk_w"]
    score = static_edge_embedding @ w / jnp.linalg.norm(w)
    k = min(static_edge_topk, static_count)
    top_scores, top_idx = jax.lax.top_k(score, k)
    static_edge_embedding = (static_edge_embedding[top_idx]
                             * jnp.tanh(top_scores)[:, None])

    # ---- type / node / graph identifiers --------------------------------------
    if use_type_identifier:
        node_embeddings = node_embedding + params["type_emb"][0]
        static_edge_embeddings = static_edge_embedding + params["type_emb"][1]
    else:
        node_embeddings = node_embedding
        static_edge_embeddings = static_edge_embedding

    graph_embedding = params["graph_tok"][graph_id].reshape(1, -1)
    if use_node_identifier:
        all_embeddings = jnp.vstack(
            [node_embeddings, static_edge_embeddings, params["orth"]])
    else:
        all_embeddings = jnp.vstack([node_embeddings, static_edge_embeddings])
    all_embeddings = jnp.vstack([graph_embedding, all_embeddings])

    # ---- linear + transformer encoder + mean + classifier (Pallas) -----------
    return tokengt_encode(all_embeddings.astype(jnp.float32), params)


# ----------------------------------------------------------------------------
if __name__ == "__main__":
    # small shapes: T=3 timesteps, N=8 nodes/step, in_channels=16, d_model=32
    T, N = 3, 8
    IN_CH, D_REAL, DFF_REAL, NUM_LAYERS = 16, 32, 64, 2
    NUM_NODES_ORTH = 8
    STATIC_EDGE_TOPK = 12

    key = jax.random.PRNGKey(0)
    k_param, k_a, k_x = jax.random.split(key, 3)

    params = init_params(k_param, IN_CH, D_REAL, DFF_REAL, NUM_LAYERS,
                         NUM_NODES_ORTH)

    # adjacency matrices (binary, zero diagonal) and node features
    a_keys = jax.random.split(k_a, T)
    x_keys = jax.random.split(k_x, T)
    A_list, Nodes_list = [], []
    for t in range(T):
        a = (jax.random.uniform(a_keys[t], (N, N)) < 0.25).astype(jnp.float32)
        a = a * (1.0 - jnp.eye(N, dtype=jnp.float32))
        A_list.append(a)
        Nodes_list.append(
            jax.random.normal(x_keys[t], (N, IN_CH)).astype(jnp.float32))

    out = tokengt_forward(A_list, Nodes_list, params,
                          time_steps=T, static_edge_topk=STATIC_EDGE_TOPK)
    out = jax.block_until_ready(out)
    assert out.shape == (1,) and bool(jnp.all(jnp.isfinite(out)))
    print("KERNEL_OK")
</pallas_src>

<mosaic_0001>
module attributes {stable_mosaic.version = 11 : i64} {
  func.func @_grcu_kernel(%arg0: i32, %arg1: memref<1x8x8xf32, #tpu.memory_space<vmem>>, %arg2: memref<1x8x16xf32, #tpu.memory_space<vmem>>, %arg3: memref<16x128xbf16, #tpu.memory_space<vmem>>, %arg4: memref<1x8x128xf32, #tpu.memory_space<vmem>>) attributes {dimension_semantics = [#tpu.dimension_semantics<parallel>], iteration_bounds = array<i64: 3>, scalar_prefetch = 0 : i64, scratch_operands = 0 : i64, tpu.core_type = #tpu.core_type<tc>, window_params = [{transform_indices = @transform_0, window_bounds = array<i64: 1, 8, 8>}, {transform_indices = @transform_1, window_bounds = array<i64: 1, 8, 16>}, {pipeline_mode = #tpu.pipeline_mode<synchronous>, transform_indices = @transform_2, window_bounds = array<i64: 16, 128>}, {transform_indices = @transform_3, window_bounds = array<i64: 1, 8, 128>}]} {
    %c0 = arith.constant 0 : index
    %c0_0 = arith.constant 0 : index
    %c0_1 = arith.constant 0 : index
    %0 = vector.load %arg2[%c0, %c0_0, %c0_1] : memref<1x8x16xf32, #tpu.memory_space<vmem>>, vector<1x8x16xf32>
    %1 = vector.shape_cast %0 : vector<1x8x16xf32> to vector<8x16xf32>
    %2 = arith.truncf %1 : vector<8x16xf32> to vector<8x16xbf16>
    %c0_2 = arith.constant 0 : index
    %c0_3 = arith.constant 0 : index
    %3 = vector.load %arg3[%c0_2, %c0_3] : memref<16x128xbf16, #tpu.memory_space<vmem>>, vector<16x128xbf16>
    %cst = arith.constant dense<0.000000e+00> : vector<8x128xf32>
    %4 = tpu.matmul %2, %3, %cst {dimension_numbers = #tpu.dot_dimension_numbers<[1], [0], [0], [1], [0, 0, 1, 1], [], []>} : vector<8x16xbf16>, vector<16x128xbf16>, vector<8x128xf32> -> vector<8x128xf32>
    %c0_4 = arith.constant 0 : index
    %c0_5 = arith.constant 0 : index
    %c0_6 = arith.constant 0 : index
    %5 = vector.load %arg1[%c0_4, %c0_5, %c0_6] : memref<1x8x8xf32, #tpu.memory_space<vmem>>, vector<1x8x8xf32>
    %6 = vector.shape_cast %5 : vector<1x8x8xf32> to vector<8x8xf32>
    %7 = arith.truncf %6 : vector<8x8xf32> to vector<8x8xbf16>
    %8 = arith.truncf %4 : vector<8x128xf32> to vector<8x128xbf16>
    %cst_7 = arith.constant dense<0.000000e+00> : vector<8x128xf32>
    %9 = tpu.matmul %7, %8, %cst_7 {dimension_numbers = #tpu.dot_dimension_numbers<[1], [0], [0], [1], [0, 0, 1, 1], [], []>} : vector<8x8xbf16>, vector<8x128xbf16>, vector<8x128xf32> -> vector<8x128xf32>
    %cst_8 = arith.constant 0.000000e+00 : f32
    %10 = vector.broadcast %cst_8 : f32 to vector<8x128xf32>
    %11 = arith.maximumf %9, %10 : vector<8x128xf32>
    %cst_9 = arith.constant 2.000000e+01 : f32
    %12 = vector.broadcast %cst_9 : f32 to vector<8x128xf32>
    %13 = arith.minimumf %11, %12 : vector<8x128xf32>
    %14 = math.exp %13 : vector<8x128xf32>
    %cst_10 = arith.constant 1.000000e+00 : f32
    %15 = vector.broadcast %cst_10 : f32 to vector<8x128xf32>
    %16 = arith.addf %15, %14 : vector<8x128xf32>
    %cst_11 = arith.constant 1.000000e+00 : f32
    %17 = vector.broadcast %cst_11 : f32 to vector<8x128xf32>
    %18 = arith.addf %17, %14 : vector<8x128xf32>
    %19 = arith.mulf %16, %18 : vector<8x128xf32>
    %cst_12 = arith.constant 1.000000e+00 : f32
    %20 = vector.broadcast %cst_12 : f32 to vector<8x128xf32>
    %21 = arith.subf %19, %20 : vector<8x128xf32>
    %22 = arith.mulf %11, %21 : vector<8x128xf32>
    %cst_13 = arith.constant 1.000000e+00 : f32
    %23 = vector.broadcast %cst_13 : f32 to vector<8x128xf32>
    %24 = arith.addf %19, %23 : vector<8x128xf32>
    %25 = tpu.reciprocal %24 {approx = true} : vector<8x128xf32> -> vector<8x128xf32>
    %26 = arith.mulf %22, %25 : vector<8x128xf32>
    %c0_14 = arith.constant 0 : index
    %c0_15 = arith.constant 0 : index
    %c0_16 = arith.constant 0 : index
    %27 = vector.load %arg4[%c0_14, %c0_15, %c0_16] : memref<1x8x128xf32, #tpu.memory_space<vmem>>, vector<1x8x128xf32>
    %28 = vector.shape_cast %27 : vector<1x8x128xf32> to vector<8x128xf32>
    %29 = vector.shape_cast %26 : vector<8x128xf32> to vector<1x8x128xf32>
    tpu.vector_store %arg4[%c0_14, %c0_15, %c0_16], %29 {strides = array<i32>} : memref<1x8x128xf32, #tpu.memory_space<vmem>>, vector<1x8x128xf32>,
    return
  }
  func.func @transform_0(%arg0: i32) -> (i32, i32, i32) {
    %c0_i32 = arith.constant 0 : i32
    %c0_i32_0 = arith.constant 0 : i32
    %c0_i32_1 = arith.constant 0 : i32
    return %arg0, %c0_i32, %c0_i32_0 : i32, i32, i32
  }
  func.func @transform_1(%arg0: i32) -> (i32, i32, i32) {
    %c0_i32 = arith.constant 0 : i32
    %c0_i32_0 = arith.constant 0 : i32
    %c0_i32_1 = arith.constant 0 : i32
    return %arg0, %c0_i32, %c0_i32_0 : i32, i32, i32
  }
  func.func @transform_2(%arg0: i32) -> (i32, i32) {
    %c0_i32 = arith.constant 0 : i32
    %c0_i32_0 = arith.constant 0 : i32
    %c0_i32_1 = arith.constant 0 : i32
    return %c0_i32, %c0_i32_0 : i32, i32
  }
  func.func @transform_3(%arg0: i32) -> (i32, i32, i32) {
    %c0_i32 = arith.constant 0 : i32
    %c0_i32_0 = arith.constant 0 : i32
    %c0_i32_1 = arith.constant 0 : i32
    return %arg0, %c0_i32, %c0_i32_0 : i32, i32, i32
  }
}

</mosaic_0001>

<llo_original>
// kernel: tpu_custom_call.1
$region0: #{tpu_custom_call.1}
  #allocation0 [shape = 'u32[]', space=smem, size = 0x4, offset = 0x4, fixed_abs, tag = 'smem constant byte address 0x4 - core index']
  #allocation1 [shape = 'u32[144,128]{1,0:T(1,128)}', space=vmem, size = 0x12000, scoped, tag = 'internal scratch']
  %s0 = inlined_call_operand.hbm [shape: f32[3,8,8], index: 0, kind: input, shape index: {}]
  %s1 = inlined_call_operand.hbm [shape: f32[3,8,16], index: 1, kind: input, shape index: {}]
  %s2 = inlined_call_operand.hbm [shape: bf16[16,128], index: 2, kind: input, shape index: {}]
  %s3 = inlined_call_operand.hbm [shape: f32[3,8,128], index: 3, kind: output, shape index: {}]
  %s4 = sld [smem:[#allocation0]]
  $region57: #{tpu_custom_call.1} parent=0
    _
  %s6 = ssub.s32 1, %s4
  %s7 = scalar_select 0, %s6, %s4
  $region1: #{tpu_custom_call.1} parent=0
    #allocation2 [shape = 'u8[8192]{0}', space=vmem, size = 0x2000, scoped, tag = 'input window, operand 0']
    #allocation3 [shape = 's32[2]{0}', space=sflag, size = 0x8, scoped, tag = 'scoped memory for tpu_custom_call.1']
    #allocation4 [shape = 's32[2]{0}', space=sflag, size = 0x8, scoped, tag = 'scoped memory for tpu_custom_call.1']
    #allocation5 [shape = 'u8[8192]{0}', space=vmem, size = 0x2000, scoped, tag = 'input window, operand 1']
    #allocation6 [shape = 's32[2]{0}', space=sflag, size = 0x8, scoped, tag = 'scoped memory for tpu_custom_call.1']
    #allocation7 [shape = 'u8[4096]{0}', space=vmem, size = 0x1000, scoped, tag = 'input window, operand 2, single buffered']
    #allocation8 [shape = 'u8[8192]{0}', space=vmem, size = 0x2000, scoped, tag = 'output window, operand 0']
    %8 = vsyncpa [#allocation3], 0
    %s9 = scalar_lea.sflag [#allocation3], 1
    %10 = vsyncpa %s9, 0
    %11 = vsyncpa [#allocation6], 0
    %s12 = scalar_lea.sflag [#allocation6], 1
    %13 = vsyncpa %s12, 0
    %14 = vsyncpa [#allocation4], 0
    %s15 = scalar_lea.sflag [#allocation4], 1
    %16 = vsyncpa %s15, 0
    loop: start=0, step=1, limit=5
    $region2: #{tpu_custom_call.1} parent=1 // loop_pre_header
      _
    $region3: #{tpu_custom_call.1} parent=1 // loop_header
      %s18 = sphi 0, %s22
      %p19 = scmp.ge.s32.totalorder %s18, 5
      %s28 = sphi 0, %s30
      %s31 = sphi 0, %s28
      %s32 = sphi 0, %s31
      %s48 = sphi 0, %s32
      %s54 = sphi 0, %s56
      %s57 = sphi 0, %s54
      %s58 = sphi 0, %s57
      %s74 = sphi 0, %s58
      %s78 = sphi 0, %s78
      %s80 = sphi 0, %s78
      %s81 = sphi 0, %s80
      %s95 = sphi 0, %s81
      %s101 = sphi 0, %s103
      %s104 = sphi 0, %s101
      %s105 = sphi 0, %s104
      %s121 = sphi 0, %s105
    $region4: #{tpu_custom_call.1} parent=1 // loop_header_branch
      %21 = sbr.rel (%p19) target = $region8
    $region5: #{tpu_custom_call.1} parent=1 // loop_body
      %s23 = ssub.s32 %s18, 1
      %s24 = ssub.s32 %s18, 2
      %s25 = sadd.s32 %s18, 1
      %s26 = ssub.s32 %s18, %s25
      %p27 = scmp.eq.s32.totalorder %s26, 0
      %s29 = sadd.s32 %s28, 1
      %s30 = scalar_select %p27, %s28, %s29
      %p33 = pneg %p27
      %p34 = scmp.eq.s32.totalorder %s18, 2
      %p35 = por %p33, %p34
      %p36 = scmp.ne.s32.totalorder %s28, %s31
      %p37 = scmp.eq.s32.totalorder %s18, 0
      %p38 = por %p36, %p37
      %p39 = scmp.ne.s32.totalorder %s28, %s31
      %p40 = scmp.eq.s32.totalorder %s23, 2
      %p41 = por %p39, %p40
      %p42 = scmp.ne.s32.totalorder %s31, %s32
      %p43 = scmp.eq.s32.totalorder %s23, 0
      %p44 = por %p42, %p43
      %p45 = scmp.ne.s32.totalorder %s31, %s32
      %p46 = scmp.eq.s32.totalorder %s24, 2
      %p47 = por %p45, %p46
      %p49 = scmp.ne.s32.totalorder %s32, %s48
      %p50 = scmp.eq.s32.totalorder %s24, 0
      %p51 = por %p49, %p50
      %s52 = ssub.s32 %s18, %s25
      %p53 = scmp.eq.s32.totalorder %s52, 0
      %s55 = sadd.s32 %s54, 1
      %s56 = scalar_select %p53, %s54, %s55
      %p59 = pneg %p53
      %p60 = scmp.eq.s32.totalorder %s18, 2
      %p61 = por %p59, %p60
      %p62 = scmp.ne.s32.totalorder %s54, %s57
      %p63 = scmp.eq.s32.totalorder %s18, 0
      %p64 = por %p62, %p63
      %p65 = scmp.ne.s32.totalorder %s54, %s57
      %p66 = scmp.eq.s32.totalorder %s23, 2
      %p67 = por %p65, %p66
      %p68 = scmp.ne.s32.totalorder %s57, %s58
      %p69 = scmp.eq.s32.totalorder %s23, 0
      %p70 = por %p68, %p69
      %p71 = scmp.ne.s32.totalorder %s57, %s58
      %p72 = scmp.eq.s32.totalorder %s24, 2
      %p73 = por %p71, %p72
      %p75 = scmp.ne.s32.totalorder %s58, %s74
      %p76 = scmp.eq.s32.totalorder %s24, 0
      %p77 = por %p75, %p76
      %s79 = sadd.s32 %s78, 1
      %p82 = scmp.eq.s32.totalorder %s18, 2
      %p83 = scmp.ne.s32.totalorder %s78, %s80
      %p84 = scmp.eq.s32.totalorder %s18, 0
      %p85 = por %p83, %p84
      %p86 = scmp.ne.s32.totalorder %s78, %s80
      %p87 = scmp.eq.s32.totalorder %s23, 2
      %p88 = por %p86, %p87
      %p89 = scmp.ne.s32.totalorder %s80, %s81
      %p90 = scmp.eq.s32.totalorder %s23, 0
      %p91 = por %p89, %p90
      %p92 = scmp.ne.s32.totalorder %s80, %s81
      %p93 = scmp.eq.s32.totalorder %s24, 2
      %p94 = por %p92, %p93
      %p96 = scmp.ne.s32.totalorder %s81, %s95
      %p97 = scmp.eq.s32.totalorder %s24, 0
      %p98 = por %p96, %p97
      %s99 = ssub.s32 %s18, %s25
      %p100 = scmp.eq.s32.totalorder %s99, 0
      %s102 = sadd.s32 %s101, 1
      %s103 = scalar_select %p100, %s101, %s102
      %p106 = pneg %p100
      %p107 = scmp.eq.s32.totalorder %s18, 2
      %p108 = por %p106, %p107
      %p109 = scmp.ne.s32.totalorder %s101, %s104
      %p110 = scmp.eq.s32.totalorder %s18, 0
      %p111 = por %p109, %p110
      %p112 = scmp.ne.s32.totalorder %s101, %s104
      %p113 = scmp.eq.s32.totalorder %s23, 2
      %p114 = por %p112, %p113
      %p115 = scmp.ne.s32.totalorder %s104, %s105
      %p116 = scmp.eq.s32.totalorder %s23, 0
      %p117 = por %p115, %p116
      %p118 = scmp.ne.s32.totalorder %s104, %s105
      %p119 = scmp.eq.s32.totalorder %s24, 2
      %p120 = por %p118, %p119
      %p122 = scmp.ne.s32.totalorder %s105, %s121
      %p123 = scmp.eq.s32.totalorder %s24, 0
      %p124 = por %p122, %p123
      %p125 = scmp.le.s32.totalorder 1, %s18
      %p126 = scmp.lt.s32.totalorder %s18, 4
      %p127 = pnand %p125, %p126
      %p128 = pneg %p127
      // Predicated region
      $region9: #{tpu_custom_call.1} parent=5 // pred_check
        _
      $region10: #{tpu_custom_call.1} parent=5 // pred_check_branch
        %130 = sbr.rel (%p127) target = $region12
      $region11: #{tpu_custom_call.1} parent=5 // pred_region
        %s131 = ssub.s32 %s18, 1
        // Predicated region
        $region13: #{tpu_custom_call.1} parent=11 // pred_check
          %p132 = pneg %p91
        $region14: #{tpu_custom_call.1} parent=11 // pred_check_branch
          %134 = sbr.rel (%p132) target = $region16
        $region15: #{tpu_custom_call.1} parent=11 // pred_region
          %s136 = ssub.s32 128, 128
          %137 = vsyncadd [#allocation6], %s136
          %s138 = sshll.u32 [#allocation7], 4
          %s139 = int_to_ptr.vmem [resolvable:$true] %s138
          %144 = dma.hbm_to_vmem [thread:$0]  %s2, 128, %s139, [#allocation6], 64, 64, 4
        $region16: #{tpu_custom_call.1} parent=11 // pred_fallthru
          _
      $region12: #{tpu_custom_call.1} parent=5 // pred_fallthru
        _
      %p145 = scmp.lt.s32.totalorder %s18, 3
      // Predicated region
      $region17: #{tpu_custom_call.1} parent=5 // pred_check
        %p146 = pneg %p145
      $region18: #{tpu_custom_call.1} parent=5 // pred_check_branch
        %148 = sbr.rel (%p146) target = $region20
      $region19: #{tpu_custom_call.1} parent=5 // pred_region
        // Predicated region
        $region21: #{tpu_custom_call.1} parent=19 // pred_check
          %p149 = pneg %p38
        $region22: #{tpu_custom_call.1} parent=19 // pred_check_branch
          %151 = sbr.rel (%p149) target = $region24
        $region23: #{tpu_custom_call.1} parent=19 // pred_region
          %s152 = sand.u32 %s28, 1
          %s153 = scalar_lea.sflag [#allocation3], %s152
          %s154 = sand.u32 %s28, 1
          %s155 = smul.addr %s154, 8
          %s156 = scalar_lea.vmem [#allocation2], %s155
          %s158 = ssub.s32 128, 128
          %159 = vsyncadd %s153, %s158
          %s160 = smul.addr %s18, 128
          %s161 = scalar_lea.hbm %s0, %s160
          %s163 = sshll.u32 %s156, 4
          %s164 = int_to_ptr.vmem [resolvable:$true] %s163
          %166 = dma.hbm_to_vmem [thread:$0]  %s161, 128, %s164, %s153
        $region24: #{tpu_custom_call.1} parent=19 // pred_fallthru
          _
        // Predicated region
        $region25: #{tpu_custom_call.1} parent=19 // pred_check
          %p167 = pneg %p64
        $region26: #{tpu_custom_call.1} parent=19 // pred_check_branch
          %169 = sbr.rel (%p167) target = $region28
        $region27: #{tpu_custom_call.1} parent=19 // pred_region
          %s170 = sand.u32 %s18, 1
          %s171 = scalar_lea.sflag [#allocation6], %s170
          %s172 = sand.u32 %s54, 1
          %s173 = smul.addr %s172, 8
          %s174 = scalar_lea.vmem [#allocation5], %s173
          %s176 = ssub.s32 128, 128
          %177 = vsyncadd %s171, %s176
          %s178 = smul.addr %s18, 128
          %s179 = scalar_lea.hbm %s1, %s178
          %s181 = sshll.u32 %s174, 4
          %s182 = int_to_ptr.vmem [resolvable:$true] %s181
          %184 = dma.hbm_to_vmem [thread:$0]  %s179, 128, %s182, %s171
        $region28: #{tpu_custom_call.1} parent=19 // pred_fallthru
          _
      $region20: #{tpu_custom_call.1} parent=5 // pred_fallthru
        _
      %p185 = scmp.le.s32.totalorder 1, %s18
      %p186 = scmp.lt.s32.totalorder %s18, 4
      %p187 = pnand %p185, %p186
      %p188 = pneg %p187
      // Predicated region
      $region29: #{tpu_custom_call.1} parent=5 // pred_check
        _
      $region30: #{tpu_custom_call.1} parent=5 // pred_check_branch
        %190 = sbr.rel (%p187) target = $region32
      $region31: #{tpu_custom_call.1} parent=5 // pred_region
        %s191 = ssub.s32 %s18, 1
        %s192 = sand.u32 %s31, 1
        %s193 = scalar_lea.sflag [#allocation3], %s192
        %s194 = sand.u32 %s31, 1
        %s195 = smul.addr %s194, 8
        %s196 = scalar_lea.vmem [#allocation2], %s195
        // Predicated region
        $region33: #{tpu_custom_call.1} parent=31 // pred_check
          %p197 = pneg %p44
        $region34: #{tpu_custom_call.1} parent=31 // pred_check_branch
          %199 = sbr.rel (%p197) target = $region36
        $region35: #{tpu_custom_call.1} parent=31 // pred_region
          %200 = dma.done %s193, 128
        $region36: #{tpu_custom_call.1} parent=31 // pred_fallthru
          _
        %s201 = sand.u32 %s23, 1
        %s202 = scalar_lea.sflag [#allocation6], %s201
        %s203 = sand.u32 %s57, 1
        %s204 = smul.addr %s203, 8
        %s205 = scalar_lea.vmem [#allocation5], %s204
        // Predicated region
        $region37: #{tpu_custom_call.1} parent=31 // pred_check
          %p206 = pneg %p70
        $region38: #{tpu_custom_call.1} parent=31 // pred_check_branch
          %208 = sbr.rel (%p206) target = $region40
        $region39: #{tpu_custom_call.1} parent=31 // pred_region
          %209 = dma.done %s202, 128
        $region40: #{tpu_custom_call.1} parent=31 // pred_fallthru
          _
        // Predicated region
        $region41: #{tpu_custom_call.1} parent=31 // pred_check
          %p210 = pneg %p91
        $region42: #{tpu_custom_call.1} parent=31 // pred_check_branch
          %212 = sbr.rel (%p210) target = $region44
        $region43: #{tpu_custom_call.1} parent=31 // pred_region
          %213 = dma.done [#allocation6], 128
        $region44: #{tpu_custom_call.1} parent=31 // pred_fallthru
          _
        %s214 = sand.u32 %s31, 1
        %s215 = scalar_lea.sflag [#allocation3], %s214
        %s216 = sand.u32 %s31, 1
        %s217 = smul.addr %s216, 8
        %s218 = scalar_lea.vmem [#allocation2], %s217
        %p219 = pneg %p44
        %p220 = pneg %p41
        %s221 = sand.u32 %s23, 1
        %s222 = scalar_lea.sflag [#allocation6], %s221
        %s223 = sand.u32 %s57, 1
        %s224 = smul.addr %s223, 8
        %s225 = scalar_lea.vmem [#allocation5], %s224
        %p226 = pneg %p70
        %p227 = pneg %p67
        %p228 = pneg %p91
        %p229 = pneg %p88
        %p230 = pneg %p117
        %p231 = pneg %p114
        %s232 = sand.u32 %s104, 1
        %s233 = scalar_lea.sflag [#allocation4], %s232
        %s234 = sand.u32 %s104, 1
        %s235 = smul.addr %s234, 8
        %s236 = scalar_lea.vmem [#allocation8], %s235
        %v238 = vld [vmem:[%s205] sm:$0xff]
        %v239 = vpack.c.bf16 %v238, %v238
        %v240 = vld [vmem:[#allocation7] sm:$0xf]
        %v241 = vld [vmem:[#allocation7 + $0x4] sm:$0xf]
        %v244 = vunpack.c.l.b16 %v240
        %v245 = vunpack.c.l.b16 %v241
        %v246 = vpack.c.b16 %v245, %v244
        %vm248 = vcmask 130048
        %v250 = vsel %vm248, %v239, 0
        %252 = vmatprep.subr.bf16.mxu0 0
        %253 = vmatpush1.bf16.msra.mxu0 %v246
        %254 = vmatprep.subr.bf16.mxu0 0
        %255 = vmatpush1.bf16.msra.mxu0 0
        %256 = vmatprep.subr.bf16.mxu0 0
        %257 = vmatpush1.bf16.msra.mxu0 0
        %258 = vmatprep.subr.bf16.mxu0 0
        %259 = vmatpush1.bf16.msra.mxu0 0
        %260 = vmatprep.subr.bf16.mxu0 0
        %261 = vmatpush1.bf16.msra.mxu0 0
        %262 = vmatprep.subr.bf16.mxu0 0
        %263 = vmatpush1.bf16.msra.mxu0 0
        %264 = vmatprep.subr.bf16.mxu0 0
        %265 = vmatpush1.bf16.msra.mxu0 0
        %266 = vmatprep.subr.bf16.mxu0 0
        %267 = vmatpush1.bf16.msra.mxu0 0
        %268 = vmatprep.subr.bf16.mxu0 0
        %269 = vmatpush1.bf16.msra.mxu0 0
        %270 = vmatprep.subr.bf16.mxu0 0
        %271 = vmatpush1.bf16.msra.mxu0 0
        %272 = vmatprep.subr.bf16.mxu0 0
        %273 = vmatpush1.bf16.msra.mxu0 0
        %274 = vmatprep.subr.bf16.mxu0 0
        %275 = vmatpush1.bf16.msra.mxu0 0
        %276 = vmatprep.subr.bf16.mxu0 0
        %277 = vmatpush1.bf16.msra.mxu0 0
        %278 = vmatprep.subr.bf16.mxu0 0
        %279 = vmatpush1.bf16.msra.mxu0 0
        %280 = vmatprep.subr.bf16.mxu0 0
        %281 = vmatpush1.bf16.msra.mxu0 0
        %282 = vmatprep.subr.bf16.mxu0 0
        %283 = vmatpush1.bf16.msra.mxu0 0
        %284 = vmatprep.mubr.bf16.mxu0 0
        %285 = vmatmul.mubr.bf16.gmra.mrb[0].mxu0 %v250
        %v286 = vpop.f32.mrb[0].mxu0
        %v287 = vadd.f32 0.0, %v286
        %v288 = vpop.f32.mrb[0].mxu0
        %v289 = vpop.f32.mrb[0].mxu0
        %v290 = vpop.f32.mrb[0].mxu0
        %291 = vdwg.mxu0
        %v292 = vld [vmem:[%s196] sm:$0xff]
        %v293 = vpack.c.bf16 %v292, %v292
        %v294 = vpack.c.bf16 %v287, %v287
        %vm295 = vcmask 64512
        %v297 = vsel %vm295, %v293, 0
        %vm299 = vcmask 1043456
        %v301 = vsel %vm299, %v294, 0
        %303 = vmatprep.subr.bf16.mxu0 0
        %304 = vmatpush1.bf16.msra.mxu0 %v301
        %305 = vmatprep.subr.bf16.mxu0 0
        %306 = vmatpush1.bf16.msra.mxu0 0
        %307 = vmatprep.subr.bf16.mxu0 0
        %308 = vmatpush1.bf16.msra.mxu0 0
        %309 = vmatprep.subr.bf16.mxu0 0
        %310 = vmatpush1.bf16.msra.mxu0 0
        %311 = vmatprep.subr.bf16.mxu0 0
        %312 = vmatpush1.bf16.msra.mxu0 0
        %313 = vmatprep.subr.bf16.mxu0 0
        %314 = vmatpush1.bf16.msra.mxu0 0
        %315 = vmatprep.subr.bf16.mxu0 0
        %316 = vmatpush1.bf16.msra.mxu0 0
        %317 = vmatprep.subr.bf16.mxu0 0
        %318 = vmatpush1.bf16.msra.mxu0 0
        %319 = vmatprep.subr.bf16.mxu0 0
        %320 = vmatpush1.bf16.msra.mxu0 0
        %321 = vmatprep.subr.bf16.mxu0 0
        %322 = vmatpush1.bf16.msra.mxu0 0
        %323 = vmatprep.subr.bf16.mxu0 0
        %324 = vmatpush1.bf16.msra.mxu0 0
        %325 = vmatprep.subr.bf16.mxu0 0
        %326 = vmatpush1.bf16.msra.mxu0 0
        %327 = vmatprep.subr.bf16.mxu0 0
        %328 = vmatpush1.bf16.msra.mxu0 0
        %329 = vmatprep.subr.bf16.mxu0 0
        %330 = vmatpush1.bf16.msra.mxu0 0
        %331 = vmatprep.subr.bf16.mxu0 0
        %332 = vmatpush1.bf16.msra.mxu0 0
        %333 = vmatprep.subr.bf16.mxu0 0
        %334 = vmatpush1.bf16.msra.mxu0 0
        %335 = vmatprep.mubr.bf16.mxu0 0
        %336 = vmatmul.mubr.bf16.gmra.mrb[0].mxu0 %v297
        %v337 = vpop.f32.mrb[0].mxu0
        %v338 = vadd.f32 0.0, %v337
        %v339 = vpop.f32.mrb[0].mxu0
        %v340 = vpop.f32.mrb[0].mxu0
        %v341 = vpop.f32.mrb[0].mxu0
        %342 = vdwg.mxu0
        %v343 = vmax.f32 %v338, 0.0
        %v344 = vmin.f32 %v343, 20.0
        %v345 = vmul.f32 %v344, 1.442695
        %v346 = vpow.pop %v345
        %v347 = vadd.f32 %v346, 1.0
        %v348 = vmul.f32 %v347, %v347
        %v349 = vsub.f32 %v348, 1.0
        %v350 = vmul.f32 %v343, %v349
        %v351 = vadd.f32 %v348, 1.0
        %v352 = vrcp.pop %v351
        %v353 = vmul.f32 %v350, %v352
        %354 = vst [vmem:[%s236] sm:$0xff] %v353
        %s355 = sand.u32 %s104, 1
        %s356 = scalar_lea.sflag [#allocation4], %s355
        %s357 = sand.u32 %s104, 1
        %s358 = smul.addr %s357, 8
        %s359 = scalar_lea.vmem [#allocation8], %s358
        // Predicated region
        $region45: #{tpu_custom_call.1} parent=31 // pred_check
          %p360 = pneg %p114
        $region46: #{tpu_custom_call.1} parent=31 // pred_check_branch
          %362 = sbr.rel (%p360) target = $region48
        $region47: #{tpu_custom_call.1} parent=31 // pred_region
          %s364 = ssub.s32 128, 128
          %365 = vsyncadd %s356, %s364
          %s366 = smul.addr %s23, 128
          %s367 = scalar_lea.hbm %s3, %s366
          %s369 = sshll.u32 %s359, 4
          %s370 = int_to_ptr.vmem [resolvable:$true] %s369
          %372 = dma.vmem_to_hbm [thread:$0]  %s370, 128, %s367, %s356
        $region48: #{tpu_custom_call.1} parent=31 // pred_fallthru
          _
      $region32: #{tpu_custom_call.1} parent=5 // pred_fallthru
        _
      %p373 = scmp.le.s32.totalorder 2, %s18
      // Predicated region
      $region49: #{tpu_custom_call.1} parent=5 // pred_check
        %p374 = pneg %p373
      $region50: #{tpu_custom_call.1} parent=5 // pred_check_branch
        %376 = sbr.rel (%p374) target = $region52
      $region51: #{tpu_custom_call.1} parent=5 // pred_region
        %s377 = ssub.s32 %s18, 2
        // Predicated region
        $region53: #{tpu_custom_call.1} parent=51 // pred_check
          %p378 = pneg %p120
        $region54: #{tpu_custom_call.1} parent=51 // pred_check_branch
          %380 = sbr.rel (%p378) target = $region56
        $region55: #{tpu_custom_call.1} parent=51 // pred_region
          %s381 = sand.u32 %s105, 1
          %s382 = scalar_lea.sflag [#allocation4], %s381
          %s383 = sand.u32 %s105, 1
          %s384 = smul.addr %s383, 8
          %s385 = scalar_lea.vmem [#allocation8], %s384
          %386 = dma.done %s382, 128
        $region56: #{tpu_custom_call.1} parent=51 // pred_fallthru
          _
      $region52: #{tpu_custom_call.1} parent=5 // pred_fallthru
        _
    $region6: #{tpu_custom_call.1} parent=1 // loop_footer
      %s22 = sadd.s32 1, %s18
    $region7: #{tpu_custom_call.1} parent=1 // loop_footer_branch
      %17 = sbr.rel target = $region3
    $region8: #{tpu_custom_call.1} parent=1 // loop_exit
      _
    %387 = vsyncpa [#allocation3], 1
    %s388 = scalar_lea.sflag [#allocation3], 1
    %389 = vsyncpa %s388, 1
    %390 = vsyncpa [#allocation6], 1
    %s391 = scalar_lea.sflag [#allocation6], 1
    %392 = vsyncpa %s391, 1
    %393 = vsyncpa [#allocation4], 1
    %s394 = scalar_lea.sflag [#allocation4], 1
    %395 = vsyncpa %s394, 1

</llo_original>
